<compile_context>
chip_gen: v7x
topology: tpu7x:2x2x1
jax: 0.10.0
libtpu: 0.0.40
codegen_flags: <defaults>
</compile_context>

<pallas_src>
import functools
import math

import jax
import jax.numpy as jnp
from jax.experimental import pallas as pl
from jax.experimental.pallas import tpu as pltpu


def _round_up(a: int, b: int) -> int:
    return ((a + b - 1) // b) * b


def _label_smoothing_kernel(x_ref, tgt_ref, loss_ref, acc_vec, acc_cnt, *,
                            padding_idx, confidence, fill, c_const):
    i = pl.program_id(1)   # row-tile axis ("arbitrary", accumulated)

    @pl.when(i == 0)
    def _init():
        acc_vec[...] = jnp.zeros_like(acc_vec)
        acc_cnt[...] = jnp.zeros_like(acc_cnt)

    x = x_ref[...].astype(jnp.float32)        # (tn, Vp) log-probs
    tgt = tgt_ref[...]                        # (tn, 1) int32 labels

    tn, vp = x.shape
    cols = jax.lax.broadcasted_iota(jnp.int32, (tn, vp), 1)

    row_valid = tgt != jnp.int32(padding_idx)            # (tn, 1)
    xm = jnp.where(row_valid, x, jnp.float32(0.0))       # zero padded / masked rows

    # td takes only {confidence, fill, 0}: two compares + two selects.
    w = jnp.where(cols == tgt, jnp.float32(confidence), jnp.float32(fill))
    w = jnp.where(cols == jnp.int32(padding_idx), jnp.float32(0.0), w)
    # Padded vocab columns (cols >= real V) have x == 0 (wrapper zero-pads),
    # so w * xm contributes nothing there even though w == fill.

    # Per-lane partial sums of  sum_ij td_ij * x_ij ; no cross-lane reduce per step.
    acc_vec[...] += jnp.sum(w * xm, axis=0, keepdims=True)      # (1, Vp)
    acc_cnt[...] += jnp.sum(row_valid.astype(jnp.float32))      # valid-row count

    @pl.when(i == pl.num_programs(1) - 1)
    def _finalize():
        loss_ref[...] = acc_cnt[...] * jnp.float32(c_const) - jnp.sum(acc_vec[...])


def label_smoothing_loss(x, target, *, size, padding_idx, smoothing=0.0,
                         row_tile=None, n_splits=2, max_block_bytes=2 << 20):
    """Forward pass of LabelSmoothing. Returns the scalar summed KL divergence."""
    assert x.ndim == 2 and x.shape[1] == size, "x.size(1) must equal self.size"
    N, V = x.shape
    confidence = 1.0 - smoothing
    fill = smoothing / (size - 2)   # NOTE: size == 2 is invalid, same as the PyTorch module.

    # Hoisted constant: C = conf*log(conf) + (V-2)*fill*log(fill)  (0*log0 := 0).
    c_const = 0.0
    if confidence > 0.0:
        c_const += confidence * math.log(confidence)
    if fill > 0.0:
        c_const += (size - 2) * fill * math.log(fill)

    # ---- layout: lane-dense vocab, large row tiles --------------------------
    v_pad = _round_up(V, 128)
    itemsize = jnp.dtype(x.dtype).itemsize
    if row_tile is None:
        budget_tn = max(8, (max_block_bytes // (v_pad * itemsize)) // 8 * 8)
        need_tn = _round_up(max(1, -(-N // n_splits)), 8)   # ceil(N/n_splits), mult of 8
        row_tile = int(min(1024, budget_tn, need_tn))
    tn = int(row_tile)
    assert tn % 8 == 0, "row_tile must be a multiple of 8"
    n_pad = _round_up(N, n_splits * tn)

    if v_pad != V or n_pad != N:
        # Zero-padded columns and rows contribute exactly 0 to the loss.
        x = jnp.pad(x, ((0, n_pad - N), (0, v_pad - V)))
    tgt = target.astype(jnp.int32)
    if n_pad != N:
        tgt = jnp.pad(tgt, (0, n_pad - N), constant_values=padding_idx)
    tgt2d = tgt.reshape(n_pad, 1)

    t_per_split = (n_pad // tn) // n_splits

    kernel = functools.partial(
        _label_smoothing_kernel,
        padding_idx=padding_idx, confidence=confidence, fill=fill, c_const=c_const)

    # Double-buffered x + tgt blocks, accumulator scratch, plus headroom.
    vmem_limit = int(min(
        32 * 1024 * 1024,
        max(16 * 1024 * 1024,
            2 * (tn * v_pad * itemsize + tn * 4) + 8 * v_pad * 4 + (4 << 20))))

    partials = pl.pallas_call(
        kernel,
        out_shape=jax.ShapeDtypeStruct((n_splits, 1, 1), jnp.float32),
        grid_spec=pltpu.PrefetchScalarGridSpec(
            num_scalar_prefetch=0,
            grid=(n_splits, t_per_split),
            in_specs=[
                pl.BlockSpec((tn, v_pad), lambda s, i: (s * t_per_split + i, 0)),
                pl.BlockSpec((tn, 1), lambda s, i: (s * t_per_split + i, 0)),
            ],
            out_specs=pl.BlockSpec((None, 1, 1), lambda s, i: (s, 0, 0)),
            scratch_shapes=[
                pltpu.VMEM((1, v_pad), jnp.float32),   # per-lane loss partials
                pltpu.VMEM((1, 1), jnp.float32),       # valid-row count
            ],
        ),
        compiler_params=pltpu.CompilerParams(
            dimension_semantics=("parallel", "arbitrary"),
            vmem_limit_bytes=vmem_limit,
        ),
    )(x, tgt2d)
    return jnp.sum(partials)


def _reference(x, target, *, size, padding_idx, smoothing):
    """Pure-JAX reference matching the PyTorch module (KLDivLoss, sum reduction)."""
    confidence = 1.0 - smoothing
    N, V = x.shape
    xf = x.astype(jnp.float32)
    td = jnp.full((N, V), smoothing / (size - 2), dtype=jnp.float32)
    td = td.at[jnp.arange(N), target].set(confidence)
    td = td.at[:, padding_idx].set(0.0)
    td = jnp.where((target == padding_idx)[:, None], 0.0, td)
    nz = td > 0
    safe = jnp.where(nz, td, 1.0)
    return jnp.sum(jnp.where(nz, td * (jnp.log(safe) - xf), 0.0))


if __name__ == "__main__":
    size = 96           # class/vocab count (self.size); padded to 128 lanes internally
    padding_idx = 0
    smoothing = 0.1
    N = 22              # ragged row count -> exercises row padding + masking

    key = jax.random.PRNGKey(0)
    klogits, ktgt = jax.random.split(key)
    logits = jax.random.normal(klogits, (N, size), dtype=jnp.float32)
    x = jax.nn.log_softmax(logits, axis=-1)          # log-probabilities, as KLDivLoss expects
    target = jax.random.randint(ktgt, (N,), 1, size, dtype=jnp.int32)
    target = target.at[3].set(padding_idx)           # exercise the padding-row mask path

    loss = label_smoothing_loss(x, target, size=size, padding_idx=padding_idx,
                                smoothing=smoothing)
    loss = jax.block_until_ready(loss)
    ref = _reference(x, target, size=size, padding_idx=padding_idx, smoothing=smoothing)
    assert jnp.allclose(loss, ref, rtol=1e-4, atol=1e-4), (loss, ref)

    # smoothing == 0 degenerates to NLL over non-padding rows; quick extra check.
    loss0 = label_smoothing_loss(x, target, size=size, padding_idx=padding_idx,
                                 smoothing=0.0)
    loss0 = jax.block_until_ready(loss0)
    ref0 = _reference(x, target, size=size, padding_idx=padding_idx, smoothing=0.0)
    assert jnp.allclose(loss0, ref0, rtol=1e-4, atol=1e-4), (loss0, ref0)

    print("KERNEL_OK")
</pallas_src>

<mosaic_0001>
module attributes {stable_mosaic.version = 11 : i64} {
  func.func @_label_smoothing_kernel(%arg0: i32, %arg1: i32, %arg2: memref<16x128xf32, #tpu.memory_space<vmem>>, %arg3: memref<16x1xi32, #tpu.memory_space<vmem>>, %arg4: memref<1x1x1xf32, #tpu.memory_space<vmem>>, %arg5: memref<1x128xf32, #tpu.memory_space<vmem>>, %arg6: memref<1x1xf32, #tpu.memory_space<vmem>>) attributes {dimension_semantics = [#tpu.dimension_semantics<parallel>, #tpu.dimension_semantics<arbitrary>], iteration_bounds = array<i64: 2, 1>, scalar_prefetch = 0 : i64, scratch_operands = 2 : i64, tpu.core_type = #tpu.core_type<tc>, window_params = [{transform_indices = @transform_0, window_bounds = array<i64: 16, 128>}, {transform_indices = @transform_1, window_bounds = array<i64: 16, 1>}, {transform_indices = @transform_2, window_bounds = array<i64: 1, 1, 1>}]} {
    %c0_i32 = arith.constant 0 : i32
    %0 = arith.cmpi eq, %arg1, %c0_i32 : i32
    %1 = arith.extui %0 : i1 to i32
    %c0_i32_0 = arith.constant 0 : i32
    %2 = arith.cmpi ne, %1, %c0_i32_0 : i32
    scf.if %2 {
      %cst_21 = arith.constant 0.000000e+00 : f32
      %40 = vector.broadcast %cst_21 : f32 to vector<1x128xf32>
      %c0_22 = arith.constant 0 : index
      %c0_23 = arith.constant 0 : index
      %41 = vector.load %arg5[%c0_22, %c0_23] : memref<1x128xf32, #tpu.memory_space<vmem>>, vector<1x128xf32>
      tpu.vector_store %arg5[%c0_22, %c0_23], %40 {strides = array<i32>} : memref<1x128xf32, #tpu.memory_space<vmem>>, vector<1x128xf32>,
      %cst_24 = arith.constant 0.000000e+00 : f32
      %42 = vector.broadcast %cst_24 : f32 to vector<1x1xf32>
      %c0_25 = arith.constant 0 : index
      %c0_26 = arith.constant 0 : index
      %43 = vector.load %arg6[%c0_25, %c0_26] : memref<1x1xf32, #tpu.memory_space<vmem>>, vector<1x1xf32>
      tpu.vector_store %arg6[%c0_25, %c0_26], %42 {strides = array<i32>} : memref<1x1xf32, #tpu.memory_space<vmem>>, vector<1x1xf32>,
    } else {
    }
    %c0 = arith.constant 0 : index
    %c0_1 = arith.constant 0 : index
    %3 = vector.load %arg2[%c0, %c0_1] : memref<16x128xf32, #tpu.memory_space<vmem>>, vector<16x128xf32>
    %c0_2 = arith.constant 0 : index
    %c0_3 = arith.constant 0 : index
    %4 = vector.load %arg3[%c0_2, %c0_3] : memref<16x1xi32, #tpu.memory_space<vmem>>, vector<16x1xi32>
    %5 = tpu.iota {dimensions = array<i32: 1>} : vector<16x128xi32>
    %c0_i32_4 = arith.constant 0 : i32
    %6 = vector.broadcast %c0_i32_4 : i32 to vector<16x1xi32>
    %7 = arith.cmpi ne, %4, %6 : vector<16x1xi32>
    %cst = arith.constant 0.000000e+00 : f32
    %8 = vector.shape_cast %7 : vector<16x1xi1> to vector<16x1xi1>
    %9 = vector.broadcast %8 : vector<16x1xi1> to vector<16x128xi1>
    %10 = vector.broadcast %cst : f32 to vector<16x128xf32>
    %11 = arith.select %9, %3, %10 : vector<16x128xi1>, vector<16x128xf32>
    %12 = vector.broadcast %4 : vector<16x1xi32> to vector<16x128xi32>
    %13 = arith.cmpi eq, %5, %12 : vector<16x128xi32>
    %cst_5 = arith.constant 0.899999976 : f32
    %cst_6 = arith.constant 0.00106382975 : f32
    %14 = vector.broadcast %cst_5 : f32 to vector<16x128xf32>
    %15 = vector.broadcast %cst_6 : f32 to vector<16x128xf32>
    %16 = arith.select %13, %14, %15 : vector<16x128xi1>, vector<16x128xf32>
    %c0_i32_7 = arith.constant 0 : i32
    %17 = vector.broadcast %c0_i32_7 : i32 to vector<16x128xi32>
    %18 = arith.cmpi eq, %5, %17 : vector<16x128xi32>
    %cst_8 = arith.constant 0.000000e+00 : f32
    %19 = vector.broadcast %cst_8 : f32 to vector<16x128xf32>
    %20 = arith.select %18, %19, %16 : vector<16x128xi1>, vector<16x128xf32>
    %c0_9 = arith.constant 0 : index
    %c0_10 = arith.constant 0 : index
    %21 = vector.load %arg5[%c0_9, %c0_10] : memref<1x128xf32, #tpu.memory_space<vmem>>, vector<1x128xf32>
    %22 = arith.mulf %20, %11 : vector<16x128xf32>
    %cst_11 = arith.constant dense<0.000000e+00> : vector<128xf32>
    %23 = vector.multi_reduction <add>, %22, %cst_11 [0] : vector<16x128xf32> to vector<128xf32>
    %24 = vector.shape_cast %23 : vector<128xf32> to vector<1x128xf32>
    %25 = arith.addf %21, %24 : vector<1x128xf32>
    %c0_12 = arith.constant 0 : index
    %c0_13 = arith.constant 0 : index
    %26 = vector.load %arg5[%c0_12, %c0_13] : memref<1x128xf32, #tpu.memory_space<vmem>>, vector<1x128xf32>
    tpu.vector_store %arg5[%c0_12, %c0_13], %25 {strides = array<i32>} : memref<1x128xf32, #tpu.memory_space<vmem>>, vector<1x128xf32>,
    %c0_14 = arith.constant 0 : index
    %c0_15 = arith.constant 0 : index
    %27 = vector.load %arg6[%c0_14, %c0_15] : memref<1x1xf32, #tpu.memory_space<vmem>>, vector<1x1xf32>
    %28 = arith.extui %7 : vector<16x1xi1> to vector<16x1xi32>
    %29 = arith.sitofp %28 : vector<16x1xi32> to vector<16x1xf32>
    %30 = vector.shape_cast %29 : vector<16x1xf32> to vector<1x16x1xf32>
    %cst_16 = arith.constant dense<0.000000e+00> : vector<1xf32>
    %31 = vector.multi_reduction <add>, %30, %cst_16 [1, 2] : vector<1x16x1xf32> to vector<1xf32>
    %32 = vector.shape_cast %31 : vector<1xf32> to vector<1x1x1xf32>
    %33 = vector.extract %32[0, 0, 0] : f32 from vector<1x1x1xf32>
    %34 = vector.broadcast %33 : f32 to vector<1x1xf32>
    %35 = arith.addf %27, %34 : vector<1x1xf32>
    %c0_17 = arith.constant 0 : index
    %c0_18 = arith.constant 0 : index
    %36 = vector.load %arg6[%c0_17, %c0_18] : memref<1x1xf32, #tpu.memory_space<vmem>>, vector<1x1xf32>
    tpu.vector_store %arg6[%c0_17, %c0_18], %35 {strides = array<i32>} : memref<1x1xf32, #tpu.memory_space<vmem>>, vector<1x1xf32>,
    %c0_i32_19 = arith.constant 0 : i32
    %37 = arith.cmpi eq, %arg1, %c0_i32_19 : i32
    %38 = arith.extui %37 : i1 to i32
    %c0_i32_20 = arith.constant 0 : i32
    %39 = arith.cmpi ne, %38, %c0_i32_20 : i32
    scf.if %39 {
      %c0_21 = arith.constant 0 : index
      %c0_22 = arith.constant 0 : index
      %40 = vector.load %arg6[%c0_21, %c0_22] : memref<1x1xf32, #tpu.memory_space<vmem>>, vector<1x1xf32>
      %cst_23 = arith.constant -0.779412448 : f32
      %41 = vector.broadcast %cst_23 : f32 to vector<1x1xf32>
      %42 = arith.mulf %40, %41 : vector<1x1xf32>
      %c0_24 = arith.constant 0 : index
      %c0_25 = arith.constant 0 : index
      %43 = vector.load %arg5[%c0_24, %c0_25] : memref<1x128xf32, #tpu.memory_space<vmem>>, vector<1x128xf32>
      %44 = vector.shape_cast %43 : vector<1x128xf32> to vector<1x1x128xf32>
      %cst_26 = arith.constant dense<0.000000e+00> : vector<1xf32>
      %45 = vector.multi_reduction <add>, %44, %cst_26 [1, 2] : vector<1x1x128xf32> to vector<1xf32>
      %46 = vector.shape_cast %45 : vector<1xf32> to vector<1x1x1xf32>
      %47 = vector.extract %46[0, 0, 0] : f32 from vector<1x1x1xf32>
      %48 = vector.broadcast %47 : f32 to vector<1x1xf32>
      %49 = arith.subf %42, %48 : vector<1x1xf32>
      %c0_27 = arith.constant 0 : index
      %c0_28 = arith.constant 0 : index
      %c0_29 = arith.constant 0 : index
      %50 = vector.load %arg4[%c0_27, %c0_28, %c0_29] : memref<1x1x1xf32, #tpu.memory_space<vmem>>, vector<1x1x1xf32>
      %51 = vector.shape_cast %50 : vector<1x1x1xf32> to vector<1x1xf32>
      %52 = vector.shape_cast %49 : vector<1x1xf32> to vector<1x1x1xf32>
      tpu.vector_store %arg4[%c0_27, %c0_28, %c0_29], %52 {strides = array<i32>} : memref<1x1x1xf32, #tpu.memory_space<vmem>>, vector<1x1x1xf32>,
    } else {
    }
    return
  }
  func.func @transform_0(%arg0: i32, %arg1: i32) -> (i32, i32) {
    %c1_i32 = arith.constant 1 : i32
    %0 = arith.muli %arg0, %c1_i32 : i32
    %1 = arith.addi %0, %arg1 : i32
    %c0_i32 = arith.constant 0 : i32
    %c0_i32_0 = arith.constant 0 : i32
    return %1, %c0_i32 : i32, i32
  }
  func.func @transform_1(%arg0: i32, %arg1: i32) -> (i32, i32) {
    %c1_i32 = arith.constant 1 : i32
    %0 = arith.muli %arg0, %c1_i32 : i32
    %1 = arith.addi %0, %arg1 : i32
    %c0_i32 = arith.constant 0 : i32
    %c0_i32_0 = arith.constant 0 : i32
    return %1, %c0_i32 : i32, i32
  }
  func.func @transform_2(%arg0: i32, %arg1: i32) -> (i32, i32, i32) {
    %c0_i32 = arith.constant 0 : i32
    %c0_i32_0 = arith.constant 0 : i32
    %c0_i32_1 = arith.constant 0 : i32
    return %arg0, %c0_i32, %c0_i32_0 : i32, i32, i32
  }
}

</mosaic_0001>

<llo_original>
// kernel: tpu_custom_call.1
$region0: #{tpu_custom_call.1}
  #allocation0 [shape = 'u32[]', space=smem, size = 0x4, offset = 0x4, fixed_abs, tag = 'smem constant byte address 0x4 - core index']
  #allocation1 [shape = 'u32[144,128]{1,0:T(1,128)}', space=vmem, size = 0x12000, scoped, tag = 'internal scratch']
  #allocation2 [shape = 'f32[1,128]{1,0:T(1,128)}', space=vmem, size = 0x200, scoped, tag = 'scratch operand']
  #allocation3 [shape = 'f32[1,1]{1,0:T(1,128)}', space=vmem, size = 0x200, scoped, tag = 'scratch operand']
  %s0 = inlined_call_operand.vmem [shape: f32[32,128], index: 0, kind: input, shape index: {}]
  %s1 = inlined_call_operand.vmem [shape: s32[32,1], index: 1, kind: input, shape index: {}]
  %s2 = inlined_call_operand.vmem [shape: f32[2,1,1], index: 2, kind: output, shape index: {}]
  %s3 = sld [smem:[#allocation0]]
  $region49: #{tpu_custom_call.1} parent=0
    _
  %s5 = ssub.s32 1, %s3
  %s6 = scalar_select 0, %s5, %s3
  loop: start=0, step=1, limit=4
  $region2: #{tpu_custom_call.1} parent=0 // loop_pre_header
    _
  $region3: #{tpu_custom_call.1} parent=0 // loop_header
    %s8 = sphi 0, %s12
    %p9 = scmp.ge.s32.totalorder %s8, 4
    %s15 = sphi 0, %s27
    %s16 = sphi 0, %s23
    %s17 = sphi 0, %s15
    %s18 = sphi 0, %s16
    %s19 = sphi 0, %s17
    %s20 = sphi 0, %s18
    %s32 = sphi 0, %s34
    %s35 = sphi 0, %s32
    %s36 = sphi 0, %s35
    %s52 = sphi 0, %s36
    %s60 = sphi 0, %s62
    %s63 = sphi 0, %s60
    %s64 = sphi 0, %s63
    %s80 = sphi 0, %s64
    %s86 = sphi 0, %s88
    %s89 = sphi 0, %s86
    %s90 = sphi 0, %s89
    %s106 = sphi 0, %s90
  $region4: #{tpu_custom_call.1} parent=0 // loop_header_branch
    %11 = sbr.rel (%p9) target = $region8
  $region5: #{tpu_custom_call.1} parent=0 // loop_body
    %s13 = ssub.s32 %s8, 1
    %s14 = ssub.s32 %s8, 2
    %s21 = sadd.s32 1, %s16
    %p22 = scmp.ge.s32.totalorder %s21, 1
    %s23 = scalar_select %p22, 0, %s21
    %s24 = sadd.s32 1, %s15
    %s25 = scalar_select %p22, %s24, %s15
    %p26 = scmp.ge.s32.totalorder %s25, 2
    %s27 = scalar_select %p26, 0, %s25
    %s28 = sadd.s32 %s15, %s16
    %s29 = sadd.s32 %s27, %s23
    %s30 = ssub.s32 %s28, %s29
    %p31 = scmp.eq.s32.totalorder %s30, 0
    %s33 = sadd.s32 %s32, 1
    %s34 = scalar_select %p31, %s32, %s33
    %p37 = pneg %p31
    %p38 = scmp.eq.s32.totalorder %s8, 1
    %p39 = por %p37, %p38
    %p40 = scmp.ne.s32.totalorder %s32, %s35
    %p41 = scmp.eq.s32.totalorder %s8, 0
    %p42 = por %p40, %p41
    %p43 = scmp.ne.s32.totalorder %s32, %s35
    %p44 = scmp.eq.s32.totalorder %s13, 1
    %p45 = por %p43, %p44
    %p46 = scmp.ne.s32.totalorder %s35, %s36
    %p47 = scmp.eq.s32.totalorder %s13, 0
    %p48 = por %p46, %p47
    %p49 = scmp.ne.s32.totalorder %s35, %s36
    %p50 = scmp.eq.s32.totalorder %s14, 1
    %p51 = por %p49, %p50
    %p53 = scmp.ne.s32.totalorder %s36, %s52
    %p54 = scmp.eq.s32.totalorder %s14, 0
    %p55 = por %p53, %p54
    %s56 = sadd.s32 %s15, %s16
    %s57 = sadd.s32 %s27, %s23
    %s58 = ssub.s32 %s56, %s57
    %p59 = scmp.eq.s32.totalorder %s58, 0
    %s61 = sadd.s32 %s60, 1
    %s62 = scalar_select %p59, %s60, %s61
    %p65 = pneg %p59
    %p66 = scmp.eq.s32.totalorder %s8, 1
    %p67 = por %p65, %p66
    %p68 = scmp.ne.s32.totalorder %s60, %s63
    %p69 = scmp.eq.s32.totalorder %s8, 0
    %p70 = por %p68, %p69
    %p71 = scmp.ne.s32.totalorder %s60, %s63
    %p72 = scmp.eq.s32.totalorder %s13, 1
    %p73 = por %p71, %p72
    %p74 = scmp.ne.s32.totalorder %s63, %s64
    %p75 = scmp.eq.s32.totalorder %s13, 0
    %p76 = por %p74, %p75
    %p77 = scmp.ne.s32.totalorder %s63, %s64
    %p78 = scmp.eq.s32.totalorder %s14, 1
    %p79 = por %p77, %p78
    %p81 = scmp.ne.s32.totalorder %s64, %s80
    %p82 = scmp.eq.s32.totalorder %s14, 0
    %p83 = por %p81, %p82
    %s84 = ssub.s32 %s15, %s27
    %p85 = scmp.eq.s32.totalorder %s84, 0
    %s87 = sadd.s32 %s86, 1
    %s88 = scalar_select %p85, %s86, %s87
    %p91 = pneg %p85
    %p92 = scmp.eq.s32.totalorder %s8, 1
    %p93 = por %p91, %p92
    %p94 = scmp.ne.s32.totalorder %s86, %s89
    %p95 = scmp.eq.s32.totalorder %s8, 0
    %p96 = por %p94, %p95
    %p97 = scmp.ne.s32.totalorder %s86, %s89
    %p98 = scmp.eq.s32.totalorder %s13, 1
    %p99 = por %p97, %p98
    %p100 = scmp.ne.s32.totalorder %s89, %s90
    %p101 = scmp.eq.s32.totalorder %s13, 0
    %p102 = por %p100, %p101
    %p103 = scmp.ne.s32.totalorder %s89, %s90
    %p104 = scmp.eq.s32.totalorder %s14, 1
    %p105 = por %p103, %p104
    %p107 = scmp.ne.s32.totalorder %s90, %s106
    %p108 = scmp.eq.s32.totalorder %s14, 0
    %p109 = por %p107, %p108
    %p110 = scmp.le.s32.totalorder 1, %s8
    %p111 = scmp.lt.s32.totalorder %s8, 3
    %p112 = pnand %p110, %p111
    %p113 = pneg %p112
    // Predicated region
    $region9: #{tpu_custom_call.1} parent=5 // pred_check
      _
    $region10: #{tpu_custom_call.1} parent=5 // pred_check_branch
      %115 = sbr.rel (%p112) target = $region12
    $region11: #{tpu_custom_call.1} parent=5 // pred_region
      %s116 = ssub.s32 %s8, 1
    $region12: #{tpu_custom_call.1} parent=5 // pred_fallthru
      _
    %p117 = scmp.lt.s32.totalorder %s8, 2
    // Predicated region
    $region13: #{tpu_custom_call.1} parent=5 // pred_check
      %p118 = pneg %p117
    $region14: #{tpu_custom_call.1} parent=5 // pred_check_branch
      %120 = sbr.rel (%p118) target = $region16
    $region15: #{tpu_custom_call.1} parent=5 // pred_region
      // Predicated region
      $region17: #{tpu_custom_call.1} parent=15 // pred_check
        %p121 = pneg %p42
      $region18: #{tpu_custom_call.1} parent=15 // pred_check_branch
        %123 = sbr.rel (%p121) target = $region20
      $region19: #{tpu_custom_call.1} parent=15 // pred_region
        %s124 = sadd.s32 %s15, %s16
        %s125 = smul.u32 2, %s124
        %p126 = scmp.lt.s32.totalorder %s125, 3
        %s127 = scalar_select %p126, %s125, 3
        %s128 = smul.addr %s127, 8
        %s129 = scalar_lea.vmem %s0, %s128
        %s130 = sadd.s32 %s15, %s16
        %s131 = smul.u32 2, %s130
      $region20: #{tpu_custom_call.1} parent=15 // pred_fallthru
        _
      // Predicated region
      $region21: #{tpu_custom_call.1} parent=15 // pred_check
        %p132 = pneg %p70
      $region22: #{tpu_custom_call.1} parent=15 // pred_check_branch
        %134 = sbr.rel (%p132) target = $region24
      $region23: #{tpu_custom_call.1} parent=15 // pred_region
        %s135 = sadd.s32 %s15, %s16
        %s136 = smul.u32 2, %s135
        %p137 = scmp.lt.s32.totalorder %s136, 3
        %s138 = scalar_select %p137, %s136, 3
        %s139 = smul.addr %s138, 8
        %s140 = scalar_lea.vmem %s1, %s139
        %s141 = sadd.s32 %s15, %s16
        %s142 = smul.u32 2, %s141
      $region24: #{tpu_custom_call.1} parent=15 // pred_fallthru
        _
    $region16: #{tpu_custom_call.1} parent=5 // pred_fallthru
      _
    %p143 = scmp.le.s32.totalorder 1, %s8
    %p144 = scmp.lt.s32.totalorder %s8, 3
    %p145 = pnand %p143, %p144
    %p146 = pneg %p145
    // Predicated region
    $region25: #{tpu_custom_call.1} parent=5 // pred_check
      _
    $region26: #{tpu_custom_call.1} parent=5 // pred_check_branch
      %148 = sbr.rel (%p145) target = $region28
    $region27: #{tpu_custom_call.1} parent=5 // pred_region
      %s149 = ssub.s32 %s8, 1
      %s150 = sadd.s32 %s17, %s18
      %s151 = smul.u32 2, %s150
      %p152 = scmp.lt.s32.totalorder %s151, 3
      %s153 = scalar_select %p152, %s151, 3
      %s154 = smul.addr %s153, 8
      %s155 = scalar_lea.vmem %s0, %s154
      %p156 = pneg %p48
      %p157 = pneg %p45
      %s158 = sadd.s32 %s17, %s18
      %s159 = smul.u32 2, %s158
      %p160 = scmp.lt.s32.totalorder %s159, 3
      %s161 = scalar_select %p160, %s159, 3
      %s162 = smul.addr %s161, 8
      %s163 = scalar_lea.vmem %s1, %s162
      %p164 = pneg %p76
      %p165 = pneg %p73
      %p166 = pneg %p102
      %p167 = pneg %p99
      %p168 = scmp.lt.s32.totalorder %s17, 1
      %s169 = scalar_select %p168, %s17, 1
      %s170 = scalar_lea.vmem %s2, %s169
      %s171 = sadd.s32 %s17, %s18
      %s172 = smul.u32 2, %s171
      %p173 = scmp.lt.s32.totalorder %s172, 3
      %s174 = scalar_select %p173, %s172, 3
      %s175 = smul.addr %s174, 8
      %s176 = scalar_lea.vmem %s0, %s175
      %s177 = sadd.s32 %s17, %s18
      %s178 = smul.u32 2, %s177
      %s179 = sadd.s32 %s17, %s18
      %s180 = smul.u32 2, %s179
      %p181 = scmp.lt.s32.totalorder %s180, 3
      %s182 = scalar_select %p181, %s180, 3
      %s183 = smul.addr %s182, 8
      %s184 = scalar_lea.vmem %s1, %s183
      %s185 = sadd.s32 %s17, %s18
      %s186 = smul.u32 2, %s185
      %p187 = scmp.lt.s32.totalorder %s17, 1
      %s188 = scalar_select %p187, %s17, 1
      %s189 = scalar_lea.vmem %s2, %s188
      %p190 = scmp.eq.s32.totalorder %s18, 0
      // Predicated region
      $region29: #{tpu_custom_call.1} parent=27 // pred_check
        %p191 = pneg %p190
      $region30: #{tpu_custom_call.1} parent=27 // pred_check_branch
        %193 = sbr.rel (%p191) target = $region32
      $region31: #{tpu_custom_call.1} parent=27 // pred_region
        %194 = vst [vmem:[#allocation2] sm:$0x1] 0.0
        %vm195 = vcmask 0
        %196 = vst.msk [vmem:[#allocation3] sm:$0x1] %vm195, 0.0
      $region32: #{tpu_custom_call.1} parent=27 // pred_fallthru
        _
      %v197 = vld [vmem:[%s176] sm:$0xff]
      %v198 = vld [vmem:[%s176 + $0x8] sm:$0xff]
      %v199 = vld [vmem:[%s184] sm:$0xff]
      %v200 = vld [vmem:[%s184 + $0x8] sm:$0xff]
      %v201 = vlaneseq
      %v202 = vand.u32 %v201, 127
      %vm203 = vcmp.ne.s32.totalorder %v199, 0
      %vm204 = vcmp.ne.s32.totalorder %v200, 0
      %v205 = vsel %vm203, 1, 0
      %v206 = vsel %vm204, 1, 0
      %207 = vset.pattern.permute.xlu0 0
      %208 = vperm.xlu0 %207, %v205
      %v209 = vpop.permute.xlu0 %208
      %210 = vset.pattern.permute.xlu0 0
      %211 = vperm.xlu0 %210, %v206
      %v212 = vpop.permute.xlu0 %211
      %vm213 = vcmp.eq.s32.totalorder %v209, 1
      %vm214 = vcmp.eq.s32.totalorder %v212, 1
      %v215 = vsel %vm213, %v197, 0.0
      %v216 = vsel %vm214, %v198, 0.0
      %217 = vset.pattern.permute.xlu0 0
      %218 = vperm.xlu0 %217, %v199
      %v219 = vpop.permute.xlu0 %218
      %220 = vset.pattern.permute.xlu0 0
      %221 = vperm.xlu0 %220, %v200
      %v222 = vpop.permute.xlu0 %221
      %vm223 = vcmp.eq.s32.totalorder %v202, %v219
      %vm224 = vcmp.eq.s32.totalorder %v202, %v222
      %v225 = vsel %vm223, 0.9, 0.0010638298
      %v226 = vsel %vm224, 0.9, 0.0010638298
      %vm227 = vcmp.eq.s32.totalorder %v202, 0
      %v228 = vsel %vm227, 0.0, %v225
      %v229 = vsel %vm227, 0.0, %v226
      %v230 = vld [vmem:[#allocation2] sm:$0x1]
      %v231 = vmul.f32 %v228, %v215
      %v232 = vmul.f32 %v229, %v216
      %v233 = vadd.f32 %v231, %v232
      %v234 = vrot.slane %v233, 4
      %v235 = vadd.f32 %v233, %v234
      %v236 = vrot.slane %v235, 2
      %v237 = vadd.f32 %v235, %v236
      %v238 = vrot.slane %v237, 1
      %v239 = vadd.f32 %v237, %v238
      %v240 = vadd.f32 %v230, %v239
      %241 = vst [vmem:[#allocation2] sm:$0x1] %v240
      %v242 = vld [vmem:[#allocation3] sm:$0x1]
      %v243 = vcvt.s32.f32 %v205
      %v244 = vcvt.s32.f32 %v206
      %vm245 = vcmask 7168
      %v246 = vsel %vm245, %v243, 0.0
      %v247 = vsel %vm245, %v244, 0.0
      %v248 = vadd.f32 %v246, %v247
      %249 = vadd.xlane.f32.xlu0 %v248
      %v250 = vpop.xlane.xlu0 %249
      %v251 = vrot.slane %v250, 4
      %v252 = vadd.f32 %v250, %v251
      %v253 = vrot.slane %v252, 2
      %v254 = vadd.f32 %v252, %v253
      %v255 = vrot.slane %v254, 1
      %v256 = vadd.f32 %v254, %v255
      %s257 = vtos %v256
      %v258 = vstv %s257
      %v259 = vadd.f32 %v242, %v258
      %vm260 = vcmask 0
      %261 = vst.msk [vmem:[#allocation3] sm:$0x1] %vm260, %v259
      // Predicated region
      $region33: #{tpu_custom_call.1} parent=27 // pred_check
        %p262 = pneg %p190
      $region34: #{tpu_custom_call.1} parent=27 // pred_check_branch
        %264 = sbr.rel (%p262) target = $region36
      $region35: #{tpu_custom_call.1} parent=27 // pred_region
        %v265 = vld [vmem:[#allocation3] sm:$0x1]
        %v266 = vmul.f32 %v265, -0.77941245
        %v267 = vld [vmem:[#allocation2] sm:$0x1]
        %vm268 = vcmask 1040384
        %v269 = vsel %vm268, %v267, 0.0
        %270 = vadd.xlane.f32.xlu0 %v269
        %v271 = vpop.xlane.xlu0 %270
        %v272 = vrot.slane %v271, 4
        %v273 = vadd.f32 %v271, %v272
        %v274 = vrot.slane %v273, 2
        %v275 = vadd.f32 %v273, %v274
        %v276 = vrot.slane %v275, 1
        %v277 = vadd.f32 %v275, %v276
        %s278 = vtos %v277
        %v279 = vstv %s278
        %v280 = vsub.f32 %v266, %v279
        %281 = vst.msk [vmem:[%s189] sm:$0x1] %vm260, %v280
      $region36: #{tpu_custom_call.1} parent=27 // pred_fallthru
        _
      %p282 = scmp.lt.s32.totalorder %s17, 1
      %s283 = scalar_select %p282, %s17, 1
      %s284 = scalar_lea.vmem %s2, %s283
      // Predicated region
      $region37: #{tpu_custom_call.1} parent=27 // pred_check
        %p285 = pneg %p99
      $region38: #{tpu_custom_call.1} parent=27 // pred_check_branch
        %287 = sbr.rel (%p285) target = $region40
      $region39: #{tpu_custom_call.1} parent=27 // pred_region
        _
      $region40: #{tpu_custom_call.1} parent=27 // pred_fallthru
        _
    $region28: #{tpu_custom_call.1} parent=5 // pred_fallthru
      _
    %p288 = scmp.le.s32.totalorder 2, %s8
    // Predicated region
    $region41: #{tpu_custom_call.1} parent=5 // pred_check
      %p289 = pneg %p288
    $region42: #{tpu_custom_call.1} parent=5 // pred_check_branch
      %291 = sbr.rel (%p289) target = $region44
    $region43: #{tpu_custom_call.1} parent=5 // pred_region
      %s292 = ssub.s32 %s8, 2
      // Predicated region
      $region45: #{tpu_custom_call.1} parent=43 // pred_check
        %p293 = pneg %p105
      $region46: #{tpu_custom_call.1} parent=43 // pred_check_branch
        %295 = sbr.rel (%p293) target = $region48
      $region47: #{tpu_custom_call.1} parent=43 // pred_region
        %p296 = scmp.lt.s32.totalorder %s19, 1
        %s297 = scalar_select %p296, %s19, 1
        %s298 = scalar_lea.vmem %s2, %s297
      $region48: #{tpu_custom_call.1} parent=43 // pred_fallthru
        _
    $region44: #{tpu_custom_call.1} parent=5 // pred_fallthru
      _
  $region6: #{tpu_custom_call.1} parent=0 // loop_footer
    %s12 = sadd.s32 1, %s8
  $region7: #{tpu_custom_call.1} parent=0 // loop_footer_branch
    %7 = sbr.rel target = $region3
  $region8: #{tpu_custom_call.1} parent=0 // loop_exit
    _

</llo_original>
